<compile_context>
chip_gen: v6e
topology: v6e:2x2x1
jax: 0.10.0
libtpu: 0.0.40
codegen_flags: <defaults>
</compile_context>

<pallas_src>
import functools
import math

import jax
import jax.numpy as jnp
from jax.experimental import pallas as pl
from jax.experimental.pallas import tpu as pltpu


# ---------------------------------------------------------------------------
# Helpers
# ---------------------------------------------------------------------------
def _round_up(x, m):
    return ((x + m - 1) // m) * m


def _pad2d(x, rows, cols):
    r, c = x.shape
    if r == rows and c == cols:
        return x
    return jnp.pad(x, ((0, rows - r), (0, cols - c)))


# ---------------------------------------------------------------------------
# Kernels
# ---------------------------------------------------------------------------
def _feature_transform_kernel(miu_ref, sigma_ref, wm_ref, ws_ref, inner_ref,
                              *, gamma):
    """Stage A: inner = concat[(miu*att)@W_miu, (sigma*att*att)@W_sigma]."""
    miu = miu_ref[...].astype(jnp.float32)
    sigma = sigma_ref[...].astype(jnp.float32)
    # Elementwise chain in f32 (EUP/VPU); only matmul operands take mm dtype.
    att = jnp.exp(-gamma * sigma)
    m_in = (miu * att).astype(wm_ref.dtype)
    s_in = (sigma * att * att).astype(ws_ref.dtype)
    m_inner = jnp.dot(m_in, wm_ref[...], preferred_element_type=jnp.float32)
    s_inner = jnp.dot(s_in, ws_ref[...], preferred_element_type=jnp.float32)
    inner_ref[...] = jnp.concatenate([m_inner, s_inner],
                                     axis=-1).astype(inner_ref.dtype)


def _aggregate_kernel(adj1_ref, adj2_ref, inner_ref, out_ref,
                      acc_m_ref, acc_s_ref, *, f_out_pad):
    """Stage B: out = concat[adj1 @ m_inner, adj2 @ s_inner], K-tiled."""
    k = pl.program_id(1)

    @pl.when(k == 0)
    def _():
        acc_m_ref[...] = jnp.zeros_like(acc_m_ref)
        acc_s_ref[...] = jnp.zeros_like(acc_s_ref)

    inner = inner_ref[...]
    acc_m_ref[...] += jnp.dot(adj1_ref[...], inner[:, :f_out_pad],
                              preferred_element_type=jnp.float32)
    acc_s_ref[...] += jnp.dot(adj2_ref[...], inner[:, f_out_pad:],
                              preferred_element_type=jnp.float32)

    @pl.when(k == pl.num_programs(1) - 1)
    def _():
        out_ref[:, :f_out_pad] = acc_m_ref[...].astype(out_ref.dtype)
        out_ref[:, f_out_pad:] = acc_s_ref[...].astype(out_ref.dtype)


def _plain_mm_kernel(miu_ref, wm_ref, out_ref):
    """No-adjacency branch: previous_miu @ weight_miu (row-tiled)."""
    out_ref[...] = jnp.dot(miu_ref[...], wm_ref[...],
                           preferred_element_type=jnp.float32
                           ).astype(out_ref.dtype)


# ---------------------------------------------------------------------------
# Wrapper
# ---------------------------------------------------------------------------
def gaussian_convolution(previous_miu, previous_sigma, weight_miu, weight_sigma,
                         adj_norm1=None, adj_norm2=None, gamma=1.0,
                         matmul_dtype=None):
    n, f_in = previous_miu.shape
    f_out = weight_miu.shape[1]
    out_dtype = previous_miu.dtype
    mm_dtype = jnp.dtype(out_dtype if matmul_dtype is None else matmul_dtype)
    mm_bytes = mm_dtype.itemsize
    out_bytes = jnp.dtype(out_dtype).itemsize

    f_out_pad = _round_up(f_out, 128)   # lane-dense output width

    # ---------------- no-adjacency branch ----------------
    if adj_norm1 is None and adj_norm2 is None:
        tma = 256
        n_pad = _round_up(n, tma)
        miu_p = _pad2d(previous_miu, n_pad, f_in).astype(mm_dtype)
        wm_p = _pad2d(weight_miu, f_in, f_out_pad).astype(mm_dtype)
        out = pl.pallas_call(
            _plain_mm_kernel,
            grid=(n_pad // tma,),
            out_shape=jax.ShapeDtypeStruct((n_pad, f_out_pad), out_dtype),
            in_specs=[pl.BlockSpec((tma, f_in), lambda i: (i, 0)),
                      pl.BlockSpec((f_in, f_out_pad), lambda i: (0, 0))],
            out_specs=pl.BlockSpec((tma, f_out_pad), lambda i: (i, 0)),
            compiler_params=pltpu.CompilerParams(
                dimension_semantics=("parallel",)),
        )(miu_p, wm_p)
        m = out[:n, :f_out]
        return m, m

    # ---------------- full branch ----------------
    # Budget-derived aggregation tiles: 2 adj streams x double-buffered
    # (TM x TK) f32 tiles + inner/out/acc stay at a few MiB -> fits all of
    # v5e / v6e / v7x scoped VMEM with room for pipelining.
    n_pad128 = _round_up(n, 128)
    if n_pad128 <= 512:
        tm = tk = n_pad = n_pad128
    else:
        tm, tk = 256, 512
        n_pad = _round_up(n, tk)          # tk % tm == 0 -> tm divides n_pad

    tma = min(512, n_pad)                 # stage-A row tile (divides n_pad)

    miu_p = _pad2d(previous_miu, n_pad, f_in)
    sigma_p = _pad2d(previous_sigma, n_pad, f_in)
    wm_p = _pad2d(weight_miu, f_in, f_out_pad).astype(mm_dtype)
    ws_p = _pad2d(weight_sigma, f_in, f_out_pad).astype(mm_dtype)
    adj1_p = _pad2d(adj_norm1, n_pad, n_pad).astype(mm_dtype)
    adj2_p = _pad2d(adj_norm2, n_pad, n_pad).astype(mm_dtype)

    # ---- Stage A: feature transform (computed once, outside the hot loop) ----
    feat_kernel = functools.partial(_feature_transform_kernel,
                                    gamma=float(gamma))
    bytes_a = (2 * n_pad * f_in * jnp.dtype(miu_p.dtype).itemsize
               + 2 * f_in * f_out_pad * mm_bytes
               + n_pad * 2 * f_out_pad * mm_bytes)
    inner = pl.pallas_call(
        feat_kernel,
        grid=(n_pad // tma,),
        out_shape=jax.ShapeDtypeStruct((n_pad, 2 * f_out_pad), mm_dtype),
        in_specs=[pl.BlockSpec((tma, f_in), lambda i: (i, 0)),
                  pl.BlockSpec((tma, f_in), lambda i: (i, 0)),
                  pl.BlockSpec((f_in, f_out_pad), lambda i: (0, 0)),
                  pl.BlockSpec((f_in, f_out_pad), lambda i: (0, 0))],
        out_specs=pl.BlockSpec((tma, 2 * f_out_pad), lambda i: (i, 0)),
        compiler_params=pltpu.CompilerParams(
            dimension_semantics=("parallel",)),
        cost_estimate=pl.CostEstimate(
            flops=int(4 * n_pad * f_in * f_out_pad),
            transcendentals=int(n_pad * f_in),
            bytes_accessed=int(bytes_a)),
    )(miu_p, sigma_p, wm_p, ws_p)

    # ---- Stage B: tiled aggregation (adj1 & adj2 fused per grid step) ----
    # TODO(synk): exploit adjacency block-sparsity via PrefetchScalarGridSpec
    # (skip empty (TM,TK) tiles) — needs a host-side tile-nonzero map.
    agg_kernel = functools.partial(_aggregate_kernel, f_out_pad=f_out_pad)
    bytes_b = (2 * n_pad * n_pad * mm_bytes
               + n_pad * 2 * f_out_pad * mm_bytes * (n_pad // tm)
               + n_pad * 2 * f_out_pad * out_bytes)
    out = pl.pallas_call(
        agg_kernel,
        grid=(n_pad // tm, n_pad // tk),
        out_shape=jax.ShapeDtypeStruct((n_pad, 2 * f_out_pad), out_dtype),
        in_specs=[pl.BlockSpec((tm, tk), lambda i, k: (i, k)),
                  pl.BlockSpec((tm, tk), lambda i, k: (i, k)),
                  pl.BlockSpec((tk, 2 * f_out_pad), lambda i, k: (k, 0))],
        out_specs=pl.BlockSpec((tm, 2 * f_out_pad), lambda i, k: (i, 0)),
        scratch_shapes=[pltpu.VMEM((tm, f_out_pad), jnp.float32),
                        pltpu.VMEM((tm, f_out_pad), jnp.float32)],
        compiler_params=pltpu.CompilerParams(
            dimension_semantics=("parallel", "arbitrary")),
        cost_estimate=pl.CostEstimate(
            flops=int(4 * n_pad * n_pad * f_out_pad),
            transcendentals=0,
            bytes_accessed=int(bytes_b)),
    )(adj1_p, adj2_p, inner)

    m = out[:n, :f_out]
    sigma_out = out[:n, f_out_pad:f_out_pad + f_out]
    return m, sigma_out


def xavier_uniform(key, shape, dtype=jnp.float32):
    fan_in, fan_out = shape
    bound = math.sqrt(6.0 / (fan_in + fan_out))
    return jax.random.uniform(key, shape, dtype, minval=-bound, maxval=bound)


# ---------------------------------------------------------------------------
# Reference (pure JAX) for sanity check
# ---------------------------------------------------------------------------
def _reference(miu, sigma, wm, ws, adj1, adj2, gamma):
    att = jnp.exp(-gamma * sigma)
    m = adj1 @ ((miu * att) @ wm)
    s = adj2 @ ((sigma * att * att) @ ws)
    return m, s


if __name__ == "__main__":
    N, F_IN, F_OUT = 32, 16, 8
    GAMMA = 1.0

    key = jax.random.PRNGKey(0)
    k_miu, k_sig, k_adj, k_wm, k_ws = jax.random.split(key, 5)

    previous_miu = jax.random.normal(k_miu, (N, F_IN), jnp.float32)
    # sigma is a variance-like quantity -> keep nonnegative
    previous_sigma = jax.random.uniform(k_sig, (N, F_IN), jnp.float32)

    # symmetric-normalized adjacency (with self loops), dense
    a = (jax.random.uniform(k_adj, (N, N)) < 0.2).astype(jnp.float32)
    a = jnp.maximum(a, a.T) + jnp.eye(N, dtype=jnp.float32)
    deg = a.sum(axis=1)
    d_inv_sqrt = 1.0 / jnp.sqrt(deg)
    adj_norm1 = a * d_inv_sqrt[:, None] * d_inv_sqrt[None, :]   # D^-1/2 A D^-1/2
    adj_norm2 = a * (1.0 / deg)[:, None]                        # D^-1 A

    weight_miu = xavier_uniform(k_wm, (F_IN, F_OUT))
    weight_sigma = xavier_uniform(k_ws, (F_IN, F_OUT))

    m, sigma = gaussian_convolution(previous_miu, previous_sigma,
                                    weight_miu, weight_sigma,
                                    adj_norm1, adj_norm2, gamma=GAMMA)
    jax.block_until_ready((m, sigma))

    m_ref, s_ref = _reference(previous_miu, previous_sigma,
                              weight_miu, weight_sigma,
                              adj_norm1, adj_norm2, GAMMA)
    assert m.shape == (N, F_OUT) and sigma.shape == (N, F_OUT)
    assert jnp.allclose(m, m_ref, atol=1e-4, rtol=1e-4)
    assert jnp.allclose(sigma, s_ref, atol=1e-4, rtol=1e-4)

    # also exercise the no-adjacency branch
    m0, m1 = gaussian_convolution(previous_miu, previous_sigma,
                                  weight_miu, weight_sigma)
    jax.block_until_ready((m0, m1))
    assert jnp.allclose(m0, previous_miu @ weight_miu, atol=1e-4, rtol=1e-4)
    assert jnp.allclose(m0, m1)

    print("KERNEL_OK")
</pallas_src>

<mosaic_0001>
module attributes {stable_mosaic.version = 11 : i64} {
  func.func @_feature_transform_kernel(%arg0: i32, %arg1: memref<128x16xf32, #tpu.memory_space<vmem>>, %arg2: memref<128x16xf32, #tpu.memory_space<vmem>>, %arg3: memref<16x128xf32, #tpu.memory_space<vmem>>, %arg4: memref<16x128xf32, #tpu.memory_space<vmem>>, %arg5: memref<128x256xf32, #tpu.memory_space<vmem>>) attributes {dimension_semantics = [#tpu.dimension_semantics<parallel>], iteration_bounds = array<i64: 1>, scalar_prefetch = 0 : i64, scratch_operands = 0 : i64, tpu.core_type = #tpu.core_type<tc>, window_params = [{transform_indices = @transform_0, window_bounds = array<i64: 128, 16>}, {transform_indices = @transform_1, window_bounds = array<i64: 128, 16>}, {pipeline_mode = #tpu.pipeline_mode<synchronous>, transform_indices = @transform_2, window_bounds = array<i64: 16, 128>}, {pipeline_mode = #tpu.pipeline_mode<synchronous>, transform_indices = @transform_3, window_bounds = array<i64: 16, 128>}, {transform_indices = @transform_4, window_bounds = array<i64: 128, 256>}]} {
    %c0 = arith.constant 0 : index
    %c0_0 = arith.constant 0 : index
    %0 = vector.load %arg1[%c0, %c0_0] : memref<128x16xf32, #tpu.memory_space<vmem>>, vector<128x16xf32>
    %c0_1 = arith.constant 0 : index
    %c0_2 = arith.constant 0 : index
    %1 = vector.load %arg2[%c0_1, %c0_2] : memref<128x16xf32, #tpu.memory_space<vmem>>, vector<128x16xf32>
    %cst = arith.constant -1.000000e+00 : f32
    %2 = vector.broadcast %cst : f32 to vector<128x16xf32>
    %3 = arith.mulf %2, %1 : vector<128x16xf32>
    %4 = math.exp %3 : vector<128x16xf32>
    %5 = arith.mulf %0, %4 : vector<128x16xf32>
    %6 = arith.mulf %1, %4 : vector<128x16xf32>
    %7 = arith.mulf %6, %4 : vector<128x16xf32>
    %c0_3 = arith.constant 0 : index
    %c0_4 = arith.constant 0 : index
    %8 = vector.load %arg3[%c0_3, %c0_4] : memref<16x128xf32, #tpu.memory_space<vmem>>, vector<16x128xf32>
    %cst_5 = arith.constant dense<0.000000e+00> : vector<128x128xf32>
    %9 = tpu.matmul %5, %8, %cst_5 {dimension_numbers = #tpu.dot_dimension_numbers<[1], [0], [0], [1], [0, 0, 1, 1], [], []>} : vector<128x16xf32>, vector<16x128xf32>, vector<128x128xf32> -> vector<128x128xf32>
    %c0_6 = arith.constant 0 : index
    %c0_7 = arith.constant 0 : index
    %10 = vector.load %arg4[%c0_6, %c0_7] : memref<16x128xf32, #tpu.memory_space<vmem>>, vector<16x128xf32>
    %cst_8 = arith.constant dense<0.000000e+00> : vector<128x128xf32>
    %11 = tpu.matmul %7, %10, %cst_8 {dimension_numbers = #tpu.dot_dimension_numbers<[1], [0], [0], [1], [0, 0, 1, 1], [], []>} : vector<128x16xf32>, vector<16x128xf32>, vector<128x128xf32> -> vector<128x128xf32>
    %12 = tpu.concatenate %9, %11 in 1 : vector<128x128xf32>, vector<128x128xf32> -> vector<128x256xf32>
    %c0_9 = arith.constant 0 : index
    %c0_10 = arith.constant 0 : index
    %13 = vector.load %arg5[%c0_9, %c0_10] : memref<128x256xf32, #tpu.memory_space<vmem>>, vector<128x256xf32>
    tpu.vector_store %arg5[%c0_9, %c0_10], %12 {strides = array<i32>} : memref<128x256xf32, #tpu.memory_space<vmem>>, vector<128x256xf32>,
    return
  }
  func.func @transform_0(%arg0: i32) -> (i32, i32) {
    %c0_i32 = arith.constant 0 : i32
    %c0_i32_0 = arith.constant 0 : i32
    return %arg0, %c0_i32 : i32, i32
  }
  func.func @transform_1(%arg0: i32) -> (i32, i32) {
    %c0_i32 = arith.constant 0 : i32
    %c0_i32_0 = arith.constant 0 : i32
    return %arg0, %c0_i32 : i32, i32
  }
  func.func @transform_2(%arg0: i32) -> (i32, i32) {
    %c0_i32 = arith.constant 0 : i32
    %c0_i32_0 = arith.constant 0 : i32
    %c0_i32_1 = arith.constant 0 : i32
    return %c0_i32, %c0_i32_0 : i32, i32
  }
  func.func @transform_3(%arg0: i32) -> (i32, i32) {
    %c0_i32 = arith.constant 0 : i32
    %c0_i32_0 = arith.constant 0 : i32
    %c0_i32_1 = arith.constant 0 : i32
    return %c0_i32, %c0_i32_0 : i32, i32
  }
  func.func @transform_4(%arg0: i32) -> (i32, i32) {
    %c0_i32 = arith.constant 0 : i32
    %c0_i32_0 = arith.constant 0 : i32
    return %arg0, %c0_i32 : i32, i32
  }
}

</mosaic_0001>

<llo_original>
// kernel: tpu_custom_call.1
$region0: #{tpu_custom_call.1}
  #allocation0 [shape = 'u32[]', space=smem, size = 0x4, offset = 0x4, fixed_abs, tag = 'smem constant byte address 0x4 - core index']
  #allocation1 [shape = 'u32[144,128]{1,0:T(1,128)}', space=vmem, size = 0x12000, scoped, tag = 'internal scratch']
  %s0 = inlined_call_operand.vmem [shape: f32[128,16], index: 0, kind: input, shape index: {}]
  %s1 = inlined_call_operand.vmem [shape: f32[128,16], index: 1, kind: input, shape index: {}]
  %s2 = inlined_call_operand.vmem [shape: f32[16,128], index: 2, kind: input, shape index: {}]
  %s3 = inlined_call_operand.vmem [shape: f32[16,128], index: 3, kind: input, shape index: {}]
  %s4 = inlined_call_operand.hbm [shape: f32[128,256], index: 4, kind: output, shape index: {}]
  %s5 = sld [smem:[#allocation0]]
  $region26: #{tpu_custom_call.1} parent=0
    _
  %s7 = ssub.s32 1, %s5
  %s8 = scalar_select 0, %s7, %s5
  $region1: #{tpu_custom_call.1} parent=0
    #allocation2 [shape = 'u8[131072]{0}', space=vmem, size = 0x20000, scoped, tag = 'output window, operand 0, single buffered']
    #allocation3 [shape = 's32[1]{0}', space=sflag, size = 0x4, scoped, tag = 'scoped memory for tpu_custom_call.1']
    %9 = vsyncpa [#allocation3], 0
    // Predicated region
    $region2: #{tpu_custom_call.1} parent=1 // pred_check
      _
    $region3: #{tpu_custom_call.1} parent=1 // pred_check_branch
      %11 = sbr.rel (0) target = $region5
    $region4: #{tpu_custom_call.1} parent=1 // pred_region
      _
    $region5: #{tpu_custom_call.1} parent=1 // pred_fallthru
      _
    // Predicated region
    $region6: #{tpu_custom_call.1} parent=1 // pred_check
      _
    $region7: #{tpu_custom_call.1} parent=1 // pred_check_branch
      %13 = sbr.rel (0) target = $region9
    $region8: #{tpu_custom_call.1} parent=1 // pred_region
      _
    $region9: #{tpu_custom_call.1} parent=1 // pred_fallthru
      _
    // Predicated region
    $region10: #{tpu_custom_call.1} parent=1 // pred_check
      _
    $region11: #{tpu_custom_call.1} parent=1 // pred_check_branch
      %15 = sbr.rel (0) target = $region13
    $region12: #{tpu_custom_call.1} parent=1 // pred_region
      _
    $region13: #{tpu_custom_call.1} parent=1 // pred_fallthru
      _
    // Predicated region
    $region14: #{tpu_custom_call.1} parent=1 // pred_check
      _
    $region15: #{tpu_custom_call.1} parent=1 // pred_check_branch
      %17 = sbr.rel (0) target = $region17
    $region16: #{tpu_custom_call.1} parent=1 // pred_region
      _
    $region17: #{tpu_custom_call.1} parent=1 // pred_fallthru
      _
    %v18 = vld [vmem:[%s0] sm:$0xff]
    %v19 = vld [vmem:[%s0 + $0x8] sm:$0xff]
    %v20 = vld [vmem:[%s0 + $0x10] sm:$0xff]
    %v21 = vld [vmem:[%s0 + $0x18] sm:$0xff]
    %v22 = vld [vmem:[%s0 + $0x20] sm:$0xff]
    %v23 = vld [vmem:[%s0 + $0x28] sm:$0xff]
    %v24 = vld [vmem:[%s0 + $0x30] sm:$0xff]
    %v25 = vld [vmem:[%s0 + $0x38] sm:$0xff]
    %v26 = vld [vmem:[%s0 + $0x40] sm:$0xff]
    %v27 = vld [vmem:[%s0 + $0x48] sm:$0xff]
    %v28 = vld [vmem:[%s0 + $0x50] sm:$0xff]
    %v29 = vld [vmem:[%s0 + $0x58] sm:$0xff]
    %v30 = vld [vmem:[%s0 + $0x60] sm:$0xff]
    %v31 = vld [vmem:[%s0 + $0x68] sm:$0xff]
    %v32 = vld [vmem:[%s0 + $0x70] sm:$0xff]
    %v33 = vld [vmem:[%s0 + $0x78] sm:$0xff]
    %v34 = vld [vmem:[%s1] sm:$0xff]
    %v35 = vld [vmem:[%s1 + $0x8] sm:$0xff]
    %v36 = vld [vmem:[%s1 + $0x10] sm:$0xff]
    %v37 = vld [vmem:[%s1 + $0x18] sm:$0xff]
    %v38 = vld [vmem:[%s1 + $0x20] sm:$0xff]
    %v39 = vld [vmem:[%s1 + $0x28] sm:$0xff]
    %v40 = vld [vmem:[%s1 + $0x30] sm:$0xff]
    %v41 = vld [vmem:[%s1 + $0x38] sm:$0xff]
    %v42 = vld [vmem:[%s1 + $0x40] sm:$0xff]
    %v43 = vld [vmem:[%s1 + $0x48] sm:$0xff]
    %v44 = vld [vmem:[%s1 + $0x50] sm:$0xff]
    %v45 = vld [vmem:[%s1 + $0x58] sm:$0xff]
    %v46 = vld [vmem:[%s1 + $0x60] sm:$0xff]
    %v47 = vld [vmem:[%s1 + $0x68] sm:$0xff]
    %v48 = vld [vmem:[%s1 + $0x70] sm:$0xff]
    %v49 = vld [vmem:[%s1 + $0x78] sm:$0xff]
    %v50 = vmul.f32 %v34, -1.0
    %v51 = vmul.f32 %v35, -1.0
    %v52 = vmul.f32 %v36, -1.0
    %v53 = vmul.f32 %v37, -1.0
    %v54 = vmul.f32 %v38, -1.0
    %v55 = vmul.f32 %v39, -1.0
    %v56 = vmul.f32 %v40, -1.0
    %v57 = vmul.f32 %v41, -1.0
    %v58 = vmul.f32 %v42, -1.0
    %v59 = vmul.f32 %v43, -1.0
    %v60 = vmul.f32 %v44, -1.0
    %v61 = vmul.f32 %v45, -1.0
    %v62 = vmul.f32 %v46, -1.0
    %v63 = vmul.f32 %v47, -1.0
    %v64 = vmul.f32 %v48, -1.0
    %v65 = vmul.f32 %v49, -1.0
    %v66 = vmul.f32 %v50, 1.442695
    %v67 = vpow.pop %v66
    %v68 = vmul.f32 %v51, 1.442695
    %v69 = vpow.pop %v68
    %v70 = vmul.f32 %v52, 1.442695
    %v71 = vpow.pop %v70
    %v72 = vmul.f32 %v53, 1.442695
    %v73 = vpow.pop %v72
    %v74 = vmul.f32 %v54, 1.442695
    %v75 = vpow.pop %v74
    %v76 = vmul.f32 %v55, 1.442695
    %v77 = vpow.pop %v76
    %v78 = vmul.f32 %v56, 1.442695
    %v79 = vpow.pop %v78
    %v80 = vmul.f32 %v57, 1.442695
    %v81 = vpow.pop %v80
    %v82 = vmul.f32 %v58, 1.442695
    %v83 = vpow.pop %v82
    %v84 = vmul.f32 %v59, 1.442695
    %v85 = vpow.pop %v84
    %v86 = vmul.f32 %v60, 1.442695
    %v87 = vpow.pop %v86
    %v88 = vmul.f32 %v61, 1.442695
    %v89 = vpow.pop %v88
    %v90 = vmul.f32 %v62, 1.442695
    %v91 = vpow.pop %v90
    %v92 = vmul.f32 %v63, 1.442695
    %v93 = vpow.pop %v92
    %v94 = vmul.f32 %v64, 1.442695
    %v95 = vpow.pop %v94
    %v96 = vmul.f32 %v65, 1.442695
    %v97 = vpow.pop %v96
    %v98 = vmul.f32 %v18, %v67
    %v99 = vmul.f32 %v19, %v69
    %v100 = vmul.f32 %v20, %v71
    %v101 = vmul.f32 %v21, %v73
    %v102 = vmul.f32 %v22, %v75
    %v103 = vmul.f32 %v23, %v77
    %v104 = vmul.f32 %v24, %v79
    %v105 = vmul.f32 %v25, %v81
    %v106 = vmul.f32 %v26, %v83
    %v107 = vmul.f32 %v27, %v85
    %v108 = vmul.f32 %v28, %v87
    %v109 = vmul.f32 %v29, %v89
    %v110 = vmul.f32 %v30, %v91
    %v111 = vmul.f32 %v31, %v93
    %v112 = vmul.f32 %v32, %v95
    %v113 = vmul.f32 %v33, %v97
    %v114 = vmul.f32 %v34, %v67
    %v115 = vmul.f32 %v35, %v69
    %v116 = vmul.f32 %v36, %v71
    %v117 = vmul.f32 %v37, %v73
    %v118 = vmul.f32 %v38, %v75
    %v119 = vmul.f32 %v39, %v77
    %v120 = vmul.f32 %v40, %v79
    %v121 = vmul.f32 %v41, %v81
    %v122 = vmul.f32 %v42, %v83
    %v123 = vmul.f32 %v43, %v85
    %v124 = vmul.f32 %v44, %v87
    %v125 = vmul.f32 %v45, %v89
    %v126 = vmul.f32 %v46, %v91
    %v127 = vmul.f32 %v47, %v93
    %v128 = vmul.f32 %v48, %v95
    %v129 = vmul.f32 %v49, %v97
    %v130 = vmul.f32 %v114, %v67
    %v131 = vmul.f32 %v115, %v69
    %v132 = vmul.f32 %v116, %v71
    %v133 = vmul.f32 %v117, %v73
    %v134 = vmul.f32 %v118, %v75
    %v135 = vmul.f32 %v119, %v77
    %v136 = vmul.f32 %v120, %v79
    %v137 = vmul.f32 %v121, %v81
    %v138 = vmul.f32 %v122, %v83
    %v139 = vmul.f32 %v123, %v85
    %v140 = vmul.f32 %v124, %v87
    %v141 = vmul.f32 %v125, %v89
    %v142 = vmul.f32 %v126, %v91
    %v143 = vmul.f32 %v127, %v93
    %v144 = vmul.f32 %v128, %v95
    %v145 = vmul.f32 %v129, %v97
    %v146 = vld [vmem:[%s2] sm:$0xff]
    %v147 = vld [vmem:[%s2 + $0x8] sm:$0xff]
    %vm148 = vcmask 130048
    %v150 = vsel %vm148, %v98, 0
    %v153 = vsel %vm148, %v99, 0
    %v156 = vsel %vm148, %v100, 0
    %v159 = vsel %vm148, %v101, 0
    %v162 = vsel %vm148, %v102, 0
    %v165 = vsel %vm148, %v103, 0
    %v168 = vsel %vm148, %v104, 0
    %v171 = vsel %vm148, %v105, 0
    %v174 = vsel %vm148, %v106, 0
    %v177 = vsel %vm148, %v107, 0
    %v180 = vsel %vm148, %v108, 0
    %v183 = vsel %vm148, %v109, 0
    %v186 = vsel %vm148, %v110, 0
    %v189 = vsel %vm148, %v111, 0
    %v192 = vsel %vm148, %v112, 0
    %v195 = vsel %vm148, %v113, 0
    %197 = vmatprep.subr.mxu0 0.0
    %198 = vmatpush1.msra.mxu0 0.0
    %199 = vmatprep.subr.mxu0 0.0
    %200 = vmatpush1.msra.mxu0 0.0
    %201 = vmatprep.subr.mxu0 0.0
    %202 = vmatpush1.msra.mxu0 0.0
    %203 = vmatprep.subr.mxu0 0.0
    %204 = vmatpush1.msra.mxu0 0.0
    %205 = vmatprep.subr.mxu0 0.0
    %206 = vmatpush1.msra.mxu0 0.0
    %207 = vmatprep.subr.mxu0 0.0
    %208 = vmatpush1.msra.mxu0 0.0
    %209 = vmatprep.subr.mxu0 0.0
    %210 = vmatpush1.msra.mxu0 0.0
    %211 = vmatprep.subr.mxu0 0.0
    %212 = vmatpush1.msra.mxu0 0.0
    %213 = vmatprep.subr.mxu0 0.0
    %214 = vmatpush1.msra.mxu0 0.0
    %215 = vmatprep.subr.mxu0 0.0
    %216 = vmatpush1.msra.mxu0 0.0
    %217 = vmatprep.subr.mxu0 0.0
    %218 = vmatpush1.msra.mxu0 0.0
    %219 = vmatprep.subr.mxu0 0.0
    %220 = vmatpush1.msra.mxu0 0.0
    %221 = vmatprep.subr.mxu0 0.0
    %222 = vmatpush1.msra.mxu0 0.0
    %223 = vmatprep.subr.mxu0 0.0
    %224 = vmatpush1.msra.mxu0 0.0
    %225 = vmatprep.subr.mxu0 0.0
    %226 = vmatpush1.msra.mxu0 %v147
    %227 = vmatprep.subr.mxu0 0.0
    %228 = vmatpush1.msra.mxu0 %v146
    %229 = vmatprep.subr.mxu0 0.0
    %230 = vmatpush2.msra.mxu0 0.0
    %231 = vmatprep.subr.mxu0 0.0
    %232 = vmatpush2.msra.mxu0 0.0
    %233 = vmatprep.subr.mxu0 0.0
    %234 = vmatpush2.msra.mxu0 0.0
    %235 = vmatprep.subr.mxu0 0.0
    %236 = vmatpush2.msra.mxu0 0.0
    %237 = vmatprep.subr.mxu0 0.0
    %238 = vmatpush2.msra.mxu0 0.0
    %239 = vmatprep.subr.mxu0 0.0
    %240 = vmatpush2.msra.mxu0 0.0
    %241 = vmatprep.subr.mxu0 0.0
    %242 = vmatpush2.msra.mxu0 0.0
    %243 = vmatprep.subr.mxu0 0.0
    %244 = vmatpush2.msra.mxu0 0.0
    %245 = vmatprep.subr.mxu0 0.0
    %246 = vmatpush2.msra.mxu0 0.0
    %247 = vmatprep.subr.mxu0 0.0
    %248 = vmatpush2.msra.mxu0 0.0
    %249 = vmatprep.subr.mxu0 0.0
    %250 = vmatpush2.msra.mxu0 0.0
    %251 = vmatprep.subr.mxu0 0.0
    %252 = vmatpush2.msra.mxu0 0.0
    %253 = vmatprep.subr.mxu0 0.0
    %254 = vmatpush2.msra.mxu0 0.0
    %255 = vmatprep.subr.mxu0 0.0
    %256 = vmatpush2.msra.mxu0 0.0
    %257 = vmatprep.subr.mxu0 0.0
    %258 = vmatpush2.msra.mxu0 0.0
    %259 = vmatprep.subr.mxu0 0.0
    %260 = vmatpush2.msra.mxu0 0.0
    %261 = vmatprep.mubr.f32.mxu0 0.0
    %262 = vmatmul.mubr.f32.gmra.mxu0 %v150
    %v263 = vpop.f32.mrf.mxu0
    %v264 = vadd.f32 0.0, %v263
    %v265 = vpop.f32.mrf.mxu0
    %266 = vmatprep.mubr.f32.mxu0 0.0
    %267 = vmatmul.mubr.f32.gmra.mxu0 %v153
    %v268 = vpop.f32.mrf.mxu0
    %v269 = vadd.f32 0.0, %v268
    %v270 = vpop.f32.mrf.mxu0
    %271 = vmatprep.mubr.f32.mxu0 0.0
    %272 = vmatmul.mubr.f32.gmra.mxu0 %v156
    %v273 = vpop.f32.mrf.mxu0
    %v274 = vadd.f32 0.0, %v273
    %v275 = vpop.f32.mrf.mxu0
    %276 = vmatprep.mubr.f32.mxu0 0.0
    %277 = vmatmul.mubr.f32.gmra.mxu0 %v159
    %v278 = vpop.f32.mrf.mxu0
    %v279 = vadd.f32 0.0, %v278
    %v280 = vpop.f32.mrf.mxu0
    %281 = vmatprep.mubr.f32.mxu0 0.0
    %282 = vmatmul.mubr.f32.gmra.mxu0 %v162
    %v283 = vpop.f32.mrf.mxu0
    %v284 = vadd.f32 0.0, %v283
    %v285 = vpop.f32.mrf.mxu0
    %286 = vmatprep.mubr.f32.mxu0 0.0
    %287 = vmatmul.mubr.f32.gmra.mxu0 %v165
    %v288 = vpop.f32.mrf.mxu0
    %v289 = vadd.f32 0.0, %v288
    %v290 = vpop.f32.mrf.mxu0
    %291 = vmatprep.mubr.f32.mxu0 0.0
    %292 = vmatmul.mubr.f32.gmra.mxu0 %v168
    %v293 = vpop.f32.mrf.mxu0
    %v294 = vadd.f32 0.0, %v293
    %v295 = vpop.f32.mrf.mxu0
    %296 = vmatprep.mubr.f32.mxu0 0.0
    %297 = vmatmul.mubr.f32.gmra.mxu0 %v171
    %v298 = vpop.f32.mrf.mxu0
    %v299 = vadd.f32 0.0, %v298
    %v300 = vpop.f32.mrf.mxu0
    %301 = vmatprep.mubr.f32.mxu0 0.0
    %302 = vmatmul.mubr.f32.gmra.mxu0 %v174
    %v303 = vpop.f32.mrf.mxu0
    %v304 = vadd.f32 0.0, %v303
    %v305 = vpop.f32.mrf.mxu0
    %306 = vmatprep.mubr.f32.mxu0 0.0
    %307 = vmatmul.mubr.f32.gmra.mxu0 %v177
    %v308 = vpop.f32.mrf.mxu0
    %v309 = vadd.f32 0.0, %v308
    %v310 = vpop.f32.mrf.mxu0
    %311 = vmatprep.mubr.f32.mxu0 0.0
    %312 = vmatmul.mubr.f32.gmra.mxu0 %v180
    %v313 = vpop.f32.mrf.mxu0
    %v314 = vadd.f32 0.0, %v313
    %v315 = vpop.f32.mrf.mxu0
    %316 = vmatprep.mubr.f32.mxu0 0.0
    %317 = vmatmul.mubr.f32.gmra.mxu0 %v183
    %v318 = vpop.f32.mrf.mxu0
    %v319 = vadd.f32 0.0, %v318
    %v320 = vpop.f32.mrf.mxu0
    %321 = vmatprep.mubr.f32.mxu0 0.0
    %322 = vmatmul.mubr.f32.gmra.mxu0 %v186
    %v323 = vpop.f32.mrf.mxu0
    %v324 = vadd.f32 0.0, %v323
    %v325 = vpop.f32.mrf.mxu0
    %326 = vmatprep.mubr.f32.mxu0 0.0
    %327 = vmatmul.mubr.f32.gmra.mxu0 %v189
    %v328 = vpop.f32.mrf.mxu0
    %v329 = vadd.f32 0.0, %v328
    %v330 = vpop.f32.mrf.mxu0
    %331 = vmatprep.mubr.f32.mxu0 0.0
    %332 = vmatmul.mubr.f32.gmra.mxu0 %v192
    %v333 = vpop.f32.mrf.mxu0
    %v334 = vadd.f32 0.0, %v333
    %v335 = vpop.f32.mrf.mxu0
    %336 = vmatprep.mubr.f32.mxu0 0.0
    %337 = vmatmul.mubr.f32.gmra.mxu0 %v195
    %v338 = vpop.f32.mrf.mxu0
    %v339 = vadd.f32 0.0, %v338
    %v340 = vpop.f32.mrf.mxu0
    %341 = vdwg.mxu0
    %v342 = vld [vmem:[%s3] sm:$0xff]
    %v343 = vld [vmem:[%s3 + $0x8] sm:$0xff]
    %v345 = vsel %vm148, %v130, 0
    %v348 = vsel %vm148, %v131, 0
    %v351 = vsel %vm148, %v132, 0
    %v354 = vsel %vm148, %v133, 0
    %v357 = vsel %vm148, %v134, 0
    %v360 = vsel %vm148, %v135, 0
    %v363 = vsel %vm148, %v136, 0
    %v366 = vsel %vm148, %v137, 0
    %v369 = vsel %vm148, %v138, 0
    %v372 = vsel %vm148, %v139, 0
    %v375 = vsel %vm148, %v140, 0
    %v378 = vsel %vm148, %v141, 0
    %v381 = vsel %vm148, %v142, 0
    %v384 = vsel %vm148, %v143, 0
    %v387 = vsel %vm148, %v144, 0
    %v390 = vsel %vm148, %v145, 0
    %392 = vmatprep.subr.mxu0 0.0
    %393 = vmatpush1.msra.mxu0 0.0
    %394 = vmatprep.subr.mxu0 0.0
    %395 = vmatpush1.msra.mxu0 0.0
    %396 = vmatprep.subr.mxu0 0.0
    %397 = vmatpush1.msra.mxu0 0.0
    %398 = vmatprep.subr.mxu0 0.0
    %399 = vmatpush1.msra.mxu0 0.0
    %400 = vmatprep.subr.mxu0 0.0
    %401 = vmatpush1.msra.mxu0 0.0
    %402 = vmatprep.subr.mxu0 0.0
    %403 = vmatpush1.msra.mxu0 0.0
    %404 = vmatprep.subr.mxu0 0.0
    %405 = vmatpush1.msra.mxu0 0.0
    %406 = vmatprep.subr.mxu0 0.0
    %407 = vmatpush1.msra.mxu0 0.0
    %408 = vmatprep.subr.mxu0 0.0
    %409 = vmatpush1.msra.mxu0 0.0
    %410 = vmatprep.subr.mxu0 0.0
    %411 = vmatpush1.msra.mxu0 0.0
    %412 = vmatprep.subr.mxu0 0.0
    %413 = vmatpush1.msra.mxu0 0.0
    %414 = vmatprep.subr.mxu0 0.0
    %415 = vmatpush1.msra.mxu0 0.0
    %416 = vmatprep.subr.mxu0 0.0
    %417 = vmatpush1.msra.mxu0 0.0
    %418 = vmatprep.subr.mxu0 0.0
    %419 = vmatpush1.msra.mxu0 0.0
    %420 = vmatprep.subr.mxu0 0.0
    %421 = vmatpush1.msra.mxu0 %v343
    %422 = vmatprep.subr.mxu0 0.0
    %423 = vmatpush1.msra.mxu0 %v342
    %424 = vmatprep.subr.mxu0 0.0
    %425 = vmatpush2.msra.mxu0 0.0
    %426 = vmatprep.subr.mxu0 0.0
    %427 = vmatpush2.msra.mxu0 0.0
    %428 = vmatprep.subr.mxu0 0.0
    %429 = vmatpush2.msra.mxu0 0.0
    %430 = vmatprep.subr.mxu0 0.0
    %431 = vmatpush2.msra.mxu0 0.0
    %432 = vmatprep.subr.mxu0 0.0
    %433 = vmatpush2.msra.mxu0 0.0
    %434 = vmatprep.subr.mxu0 0.0
    %435 = vmatpush2.msra.mxu0 0.0
    %436 = vmatprep.subr.mxu0 0.0
    %437 = vmatpush2.msra.mxu0 0.0
    %438 = vmatprep.subr.mxu0 0.0
    %439 = vmatpush2.msra.mxu0 0.0
    %440 = vmatprep.subr.mxu0 0.0
    %441 = vmatpush2.msra.mxu0 0.0
    %442 = vmatprep.subr.mxu0 0.0
    %443 = vmatpush2.msra.mxu0 0.0
    %444 = vmatprep.subr.mxu0 0.0
    %445 = vmatpush2.msra.mxu0 0.0
    %446 = vmatprep.subr.mxu0 0.0
    %447 = vmatpush2.msra.mxu0 0.0
    %448 = vmatprep.subr.mxu0 0.0
    %449 = vmatpush2.msra.mxu0 0.0
    %450 = vmatprep.subr.mxu0 0.0
    %451 = vmatpush2.msra.mxu0 0.0
    %452 = vmatprep.subr.mxu0 0.0
    %453 = vmatpush2.msra.mxu0 0.0
    %454 = vmatprep.subr.mxu0 0.0
    %455 = vmatpush2.msra.mxu0 0.0
    %456 = vmatprep.mubr.f32.mxu0 0.0
    %457 = vmatmul.mubr.f32.gmra.mxu0 %v345
    %v458 = vpop.f32.mrf.mxu0
    %v459 = vadd.f32 0.0, %v458
    %v460 = vpop.f32.mrf.mxu0
    %461 = vmatprep.mubr.f32.mxu0 0.0
    %462 = vmatmul.mubr.f32.gmra.mxu0 %v348
    %v463 = vpop.f32.mrf.mxu0
    %v464 = vadd.f32 0.0, %v463
    %v465 = vpop.f32.mrf.mxu0
    %466 = vmatprep.mubr.f32.mxu0 0.0
    %467 = vmatmul.mubr.f32.gmra.mxu0 %v351
    %v468 = vpop.f32.mrf.mxu0
    %v469 = vadd.f32 0.0, %v468
    %v470 = vpop.f32.mrf.mxu0
    %471 = vmatprep.mubr.f32.mxu0 0.0
    %472 = vmatmul.mubr.f32.gmra.mxu0 %v354
    %v473 = vpop.f32.mrf.mxu0
    %v474 = vadd.f32 0.0, %v473
    %v475 = vpop.f32.mrf.mxu0
    %476 = vmatprep.mubr.f32.mxu0 0.0
    %477 = vmatmul.mubr.f32.gmra.mxu0 %v357
    %v478 = vpop.f32.mrf.mxu0
    %v479 = vadd.f32 0.0, %v478
    %v480 = vpop.f32.mrf.mxu0
    %481 = vmatprep.mubr.f32.mxu0 0.0
    %482 = vmatmul.mubr.f32.gmra.mxu0 %v360
    %v483 = vpop.f32.mrf.mxu0
    %v484 = vadd.f32 0.0, %v483
    %v485 = vpop.f32.mrf.mxu0
    %486 = vmatprep.mubr.f32.mxu0 0.0
    %487 = vmatmul.mubr.f32.gmra.mxu0 %v363
    %v488 = vpop.f32.mrf.mxu0
    %v489 = vadd.f32 0.0, %v488
    %v490 = vpop.f32.mrf.mxu0
    %491 = vmatprep.mubr.f32.mxu0 0.0
    %492 = vmatmul.mubr.f32.gmra.mxu0 %v366
    %v493 = vpop.f32.mrf.mxu0
    %v494 = vadd.f32 0.0, %v493
    %v495 = vpop.f32.mrf.mxu0
    %496 = vmatprep.mubr.f32.mxu0 0.0
    %497 = vmatmul.mubr.f32.gmra.mxu0 %v369
    %v498 = vpop.f32.mrf.mxu0
    %v499 = vadd.f32 0.0, %v498
    %v500 = vpop.f32.mrf.mxu0
    %501 = vmatprep.mubr.f32.mxu0 0.0
    %502 = vmatmul.mubr.f32.gmra.mxu0 %v372
    %v503 = vpop.f32.mrf.mxu0
    %v504 = vadd.f32 0.0, %v503
    %v505 = vpop.f32.mrf.mxu0
    %506 = vmatprep.mubr.f32.mxu0 0.0
    %507 = vmatmul.mubr.f32.gmra.mxu0 %v375
    %v508 = vpop.f32.mrf.mxu0
    %v509 = vadd.f32 0.0, %v508
    %v510 = vpop.f32.mrf.mxu0
    %511 = vmatprep.mubr.f32.mxu0 0.0
    %512 = vmatmul.mubr.f32.gmra.mxu0 %v378
    %v513 = vpop.f32.mrf.mxu0
    %v514 = vadd.f32 0.0, %v513
    %v515 = vpop.f32.mrf.mxu0
    %516 = vmatprep.mubr.f32.mxu0 0.0
    %517 = vmatmul.mubr.f32.gmra.mxu0 %v381
    %v518 = vpop.f32.mrf.mxu0
    %v519 = vadd.f32 0.0, %v518
    %v520 = vpop.f32.mrf.mxu0
    %521 = vmatprep.mubr.f32.mxu0 0.0
    %522 = vmatmul.mubr.f32.gmra.mxu0 %v384
    %v523 = vpop.f32.mrf.mxu0
    %v524 = vadd.f32 0.0, %v523
    %v525 = vpop.f32.mrf.mxu0
    %526 = vmatprep.mubr.f32.mxu0 0.0
    %527 = vmatmul.mubr.f32.gmra.mxu0 %v387
    %v528 = vpop.f32.mrf.mxu0
    %v529 = vadd.f32 0.0, %v528
    %v530 = vpop.f32.mrf.mxu0
    %531 = vmatprep.mubr.f32.mxu0 0.0
    %532 = vmatmul.mubr.f32.gmra.mxu0 %v390
    %v533 = vpop.f32.mrf.mxu0
    %v534 = vadd.f32 0.0, %v533
    %v535 = vpop.f32.mrf.mxu0
    %536 = vdwg.mxu0
    %537 = vst [vmem:[#allocation2] sm:$0xff] %v264
    %538 = vst [vmem:[#allocation2 + $0x8] sm:$0xff] %v459
    %539 = vst [vmem:[#allocation2 + $0x10] sm:$0xff] %v269
    %540 = vst [vmem:[#allocation2 + $0x18] sm:$0xff] %v464
    %541 = vst [vmem:[#allocation2 + $0x20] sm:$0xff] %v274
    %542 = vst [vmem:[#allocation2 + $0x28] sm:$0xff] %v469
    %543 = vst [vmem:[#allocation2 + $0x30] sm:$0xff] %v279
    %544 = vst [vmem:[#allocation2 + $0x38] sm:$0xff] %v474
    %545 = vst [vmem:[#allocation2 + $0x40] sm:$0xff] %v284
    %546 = vst [vmem:[#allocation2 + $0x48] sm:$0xff] %v479
    %547 = vst [vmem:[#allocation2 + $0x50] sm:$0xff] %v289
    %548 = vst [vmem:[#allocation2 + $0x58] sm:$0xff] %v484
    %549 = vst [vmem:[#allocation2 + $0x60] sm:$0xff] %v294
    %550 = vst [vmem:[#allocation2 + $0x68] sm:$0xff] %v489
    %551 = vst [vmem:[#allocation2 + $0x70] sm:$0xff] %v299
    %552 = vst [vmem:[#allocation2 + $0x78] sm:$0xff] %v494
    %553 = vst [vmem:[#allocation2 + $0x80] sm:$0xff] %v304
    %554 = vst [vmem:[#allocation2 + $0x88] sm:$0xff] %v499
    %555 = vst [vmem:[#allocation2 + $0x90] sm:$0xff] %v309
    %556 = vst [vmem:[#allocation2 + $0x98] sm:$0xff] %v504
    %557 = vst [vmem:[#allocation2 + $0xa0] sm:$0xff] %v314
    %558 = vst [vmem:[#allocation2 + $0xa8] sm:$0xff] %v509
    %559 = vst [vmem:[#allocation2 + $0xb0] sm:$0xff] %v319
    %560 = vst [vmem:[#allocation2 + $0xb8] sm:$0xff] %v514
    %561 = vst [vmem:[#allocation2 + $0xc0] sm:$0xff] %v324
    %562 = vst [vmem:[#allocation2 + $0xc8] sm:$0xff] %v519
    %563 = vst [vmem:[#allocation2 + $0xd0] sm:$0xff] %v329
    %564 = vst [vmem:[#allocation2 + $0xd8] sm:$0xff] %v524
    %565 = vst [vmem:[#allocation2 + $0xe0] sm:$0xff] %v334
    %566 = vst [vmem:[#allocation2 + $0xe8] sm:$0xff] %v529
    %567 = vst [vmem:[#allocation2 + $0xf0] sm:$0xff] %v339
    %568 = vst [vmem:[#allocation2 + $0xf8] sm:$0xff] %v534
    // Predicated region
    $region18: #{tpu_custom_call.1} parent=1 // pred_check
      _
    $region19: #{tpu_custom_call.1} parent=1 // pred_check_branch
      %570 = sbr.rel (0) target = $region21
    $region20: #{tpu_custom_call.1} parent=1 // pred_region
      %s572 = ssub.s32 4096, 4096
      %573 = vsyncadd [#allocation3], %s572
      %s574 = sshll.u32 [#allocation2], 4
      %s575 = int_to_ptr.vmem [resolvable:$true] %s574
      %580 = dma.vmem_to_hbm [thread:$0]  %s575, 4096, %s4, [#allocation3], 256, 256, 16
    $region21: #{tpu_custom_call.1} parent=1 // pred_fallthru
      _
    // Predicated region
    $region22: #{tpu_custom_call.1} parent=1 // pred_check
      _
    $region23: #{tpu_custom_call.1} parent=1 // pred_check_branch
      %582 = sbr.rel (0) target = $region25
    $region24: #{tpu_custom_call.1} parent=1 // pred_region
      %583 = dma.done [#allocation3], 4096
    $region25: #{tpu_custom_call.1} parent=1 // pred_fallthru
      _
    %584 = vsyncpa [#allocation3], 1

</llo_original>
